<compile_context>
chip_gen: v7x
topology: tpu7x:2x2x1
jax: 0.10.0
libtpu: 0.0.40
codegen_flags: <defaults>
</compile_context>

<pallas_src>
import math

import jax
import jax.numpy as jnp
from jax.experimental import pallas as pl
from jax.experimental.pallas import tpu as pltpu


def _round_up(x, m):
    return (x + m - 1) // m * m


# --------------------------------------------------------------------------
# Kernels
# --------------------------------------------------------------------------
def _support_kernel(x_ref, w_ref, s_ref):
    # x_ref: (1, TN, Dp) input dtype, w_ref: (Dp, Dp), s_ref: (1, TN, Dp) bf16
    xs = x_ref[0].astype(jnp.bfloat16)
    ws = w_ref[...].astype(jnp.bfloat16)
    s_ref[0] = jnp.dot(xs, ws, preferred_element_type=jnp.float32).astype(s_ref.dtype)


def _adj_kernel(sup_ref, adj_ref, xres_ref, o_ref):
    # sup_ref:  (1, Np, Dp) bf16, resident per batch element
    # adj_ref:  (1, TN, Np) native dtype -> cast to bf16 in-kernel (no extra
    #           wrapper-side HBM pass over the N^2 array)
    # xres_ref: (1, TN, Dp) residual tile (input dtype)
    # o_ref:    (1, TN, Dp) output tile
    a = adj_ref[0].astype(jnp.bfloat16)
    out = jnp.dot(a, sup_ref[0], preferred_element_type=jnp.float32)
    o_ref[0] = (out + xres_ref[0].astype(jnp.float32)).astype(o_ref.dtype)


# --------------------------------------------------------------------------
# Helpers
# --------------------------------------------------------------------------
def _vmem_capacity_bytes():
    try:
        return int(pltpu.get_tpu_info().vmem_capacity_bytes)
    except Exception:
        return 64 * 1024 * 1024  # conservative default (v7x: 64 MiB / TensorCore)


def _spec(shape, index_map, buffers=None):
    """BlockSpec with an optional non-default buffer count (graceful fallback)."""
    if buffers is not None and buffers != 2:
        try:
            return pl.BlockSpec(shape, index_map, pipeline_mode=pl.Buffered(buffers))
        except Exception:
            pass
    return pl.BlockSpec(shape, index_map)


# --------------------------------------------------------------------------
# Wrapper
# --------------------------------------------------------------------------
def graph_convolution(x, adj, weight):
    """x: (B, N, D), adj: (B, N, N), weight: (D, D) -> (B, N, D)."""
    B, N, D = x.shape
    assert adj.shape == (B, N, N)
    assert weight.shape == (D, D)

    x_item = x.dtype.itemsize
    adj_item = adj.dtype.itemsize
    w_item = weight.dtype.itemsize

    Dp = _round_up(D, 128)
    N128 = _round_up(N, 128)        # pad tiny graphs up to full vreg/MXU width

    # ---- generation-aware VMEM budget & row-tile selection -----------------
    vmem_cap = _vmem_capacity_bytes()
    big_vmem = vmem_cap >= 96 * 1024 * 1024            # 128 MiB parts (v5e/v6e)
    vmem_ceiling = (100 if big_vmem else 56) * 1024 * 1024
    adj_bufs = 3 if big_vmem else 2                     # deeper adj pipeline on 128 MiB parts

    base = (1024, 512, 256, 128) if big_vmem else (256, 128)
    candidates = sorted({min(t, N128) for t in base}, reverse=True)

    def footprint(tn):
        np_ = _round_up(max(N, 128), tn)
        fp = (2 * np_ * Dp * 2                 # resident support (counted x2 to be safe)
              + adj_bufs * tn * np_ * adj_item  # adj tiles (native dtype)
              + 2 * tn * Dp * x_item            # residual tiles
              + 2 * tn * Dp * x_item)           # output tiles
        return np_, fp

    TN = candidates[-1]
    for t in candidates:
        _, fp = footprint(t)
        if fp + (6 << 20) <= vmem_ceiling:
            TN = t
            break
    Np, fp_adj = footprint(TN)
    n_row_tiles = Np // TN

    fp_sup = (2 * TN * Dp * x_item + 2 * Dp * Dp * w_item + 2 * TN * Dp * 2)

    def vmem_limit(fp):
        lim = fp + max(fp // 4, 4 << 20)
        lim = max(lim, 32 << 20)
        return int(min(lim, vmem_ceiling))

    # ---- padding (zero padding is exact; sliced off at the end) ------------
    def pad_to(a, shape):
        pads = [(0, t - s) for s, t in zip(a.shape, shape)]
        return jnp.pad(a, pads) if any(p for _, p in pads) else a

    x_p = pad_to(x, (B, Np, Dp))            # input dtype (residual stays exact)
    adj_p = pad_to(adj, (B, Np, Np))        # native dtype; cast to bf16 in-kernel
    w_p = pad_to(weight, (Dp, Dp))

    # ---- the two pallas_calls ----------------------------------------------
    def run(use_buffered):
        buf = (lambda n: n) if use_buffered else (lambda n: None)

        support = pl.pallas_call(
            _support_kernel,
            out_shape=jax.ShapeDtypeStruct((B, Np, Dp), jnp.bfloat16),
            grid_spec=pltpu.PrefetchScalarGridSpec(
                num_scalar_prefetch=0,
                grid=(B, n_row_tiles),
                in_specs=[
                    _spec((1, TN, Dp), lambda b, j: (b, j, 0)),            # x row tile
                    _spec((Dp, Dp), lambda b, j: (0, 0), buffers=buf(1)),  # weight, never re-fetched
                ],
                out_specs=pl.BlockSpec((1, TN, Dp), lambda b, j: (b, j, 0)),
            ),
            compiler_params=pltpu.CompilerParams(
                dimension_semantics=("parallel", "parallel"),
                vmem_limit_bytes=vmem_limit(fp_sup),
            ),
            cost_estimate=pl.CostEstimate(
                flops=2 * B * Np * Dp * Dp,
                transcendentals=0,
                bytes_accessed=(x_p.size * x_item + w_p.size * w_item
                                + B * Np * Dp * 2),
            ),
        )(x_p, w_p)

        out_p = pl.pallas_call(
            _adj_kernel,
            out_shape=jax.ShapeDtypeStruct((B, Np, Dp), x.dtype),
            grid_spec=pltpu.PrefetchScalarGridSpec(
                num_scalar_prefetch=0,
                grid=(B, n_row_tiles),
                in_specs=[
                    _spec((1, Np, Dp), lambda b, j: (b, 0, 0),
                          buffers=buf(1)),                             # support, resident per b
                    _spec((1, TN, Np), lambda b, j: (b, j, 0),
                          buffers=buf(adj_bufs)),                      # adj row tile
                    _spec((1, TN, Dp), lambda b, j: (b, j, 0)),        # residual tile
                ],
                out_specs=pl.BlockSpec((1, TN, Dp), lambda b, j: (b, j, 0)),
            ),
            compiler_params=pltpu.CompilerParams(
                dimension_semantics=("parallel", "parallel"),
                vmem_limit_bytes=vmem_limit(fp_adj),
            ),
            cost_estimate=pl.CostEstimate(
                flops=2 * B * Np * Np * Dp,
                transcendentals=0,
                bytes_accessed=(adj_p.size * adj_item + B * Np * Dp * 2
                                + x_p.size * x_item + B * Np * Dp * x_item),
            ),
        )(support, adj_p, x_p)
        return out_p

    try:
        out_p = run(True)
    except Exception:
        # Fall back to default (double) buffering if pipeline_mode is rejected.
        out_p = run(False)

    if (Np, Dp) != (N, D):
        out_p = out_p[:, :N, :D]
    return out_p


def xavier_uniform(key, fan_in, fan_out, dtype=jnp.float32):
    # matches torch.nn.init.xavier_uniform_ (gain=1)
    bound = math.sqrt(6.0 / (fan_in + fan_out))
    return jax.random.uniform(key, (fan_in, fan_out), dtype,
                              minval=-bound, maxval=bound)


if __name__ == "__main__":
    B, N, D = 2, 8, 32   # batch, nodes (sequence length), features (in == out)

    key = jax.random.PRNGKey(0)
    kx, ka, kw = jax.random.split(key, 3)

    x = jax.random.normal(kx, (B, N, D), dtype=jnp.float32)
    # simple symmetric, row-normalized adjacency
    a = jax.random.uniform(ka, (B, N, N), dtype=jnp.float32)
    a = 0.5 * (a + jnp.transpose(a, (0, 2, 1))) + jnp.eye(N)[None]
    adj = a / jnp.sum(a, axis=-1, keepdims=True)

    weight = xavier_uniform(kw, D, D)

    out = graph_convolution(x, adj, weight)
    out = jax.block_until_ready(out)

    # pure-JAX reference of the torch forward (bias=None, identity residual)
    ref = jnp.einsum("bnm,bmd->bnd", adj, jnp.einsum("bnd,de->bne", x, weight)) + x
    assert out.shape == (B, N, D)
    # bf16 MXU operands with f32 accumulation -> relaxed tolerance vs f32 ref
    assert jnp.allclose(out, ref, atol=2e-2, rtol=2e-2)

    print("KERNEL_OK")
</pallas_src>

<mosaic_0001>
module attributes {stable_mosaic.version = 11 : i64} {
  func.func @_support_kernel(%arg0: i32, %arg1: i32, %arg2: memref<1x128x128xf32, #tpu.memory_space<vmem>>, %arg3: memref<128x128xf32, #tpu.memory_space<vmem>>, %arg4: memref<1x128x128xbf16, #tpu.memory_space<vmem>>) attributes {dimension_semantics = [#tpu.dimension_semantics<parallel>, #tpu.dimension_semantics<parallel>], iteration_bounds = array<i64: 2, 1>, scalar_prefetch = 0 : i64, scratch_operands = 0 : i64, tpu.core_type = #tpu.core_type<tc>, window_params = [{transform_indices = @transform_0, window_bounds = array<i64: 1, 128, 128>}, {pipeline_mode = #tpu.pipeline_mode<synchronous>, transform_indices = @transform_1, window_bounds = array<i64: 128, 128>}, {transform_indices = @transform_2, window_bounds = array<i64: 1, 128, 128>}]} {
    %c0 = arith.constant 0 : index
    %c0_0 = arith.constant 0 : index
    %c0_1 = arith.constant 0 : index
    %0 = vector.load %arg2[%c0, %c0_0, %c0_1] : memref<1x128x128xf32, #tpu.memory_space<vmem>>, vector<1x128x128xf32>
    %1 = vector.shape_cast %0 : vector<1x128x128xf32> to vector<128x128xf32>
    %2 = arith.truncf %1 : vector<128x128xf32> to vector<128x128xbf16>
    %c0_2 = arith.constant 0 : index
    %c0_3 = arith.constant 0 : index
    %3 = vector.load %arg3[%c0_2, %c0_3] : memref<128x128xf32, #tpu.memory_space<vmem>>, vector<128x128xf32>
    %4 = arith.truncf %3 : vector<128x128xf32> to vector<128x128xbf16>
    %cst = arith.constant dense<0.000000e+00> : vector<128x128xf32>
    %5 = tpu.matmul %2, %4, %cst {dimension_numbers = #tpu.dot_dimension_numbers<[1], [0], [0], [1], [0, 0, 1, 1], [], []>} : vector<128x128xbf16>, vector<128x128xbf16>, vector<128x128xf32> -> vector<128x128xf32>
    %6 = arith.truncf %5 : vector<128x128xf32> to vector<128x128xbf16>
    %c0_4 = arith.constant 0 : index
    %c0_5 = arith.constant 0 : index
    %c0_6 = arith.constant 0 : index
    %7 = vector.load %arg4[%c0_4, %c0_5, %c0_6] : memref<1x128x128xbf16, #tpu.memory_space<vmem>>, vector<1x128x128xbf16>
    %8 = vector.shape_cast %7 : vector<1x128x128xbf16> to vector<128x128xbf16>
    %9 = vector.shape_cast %6 : vector<128x128xbf16> to vector<1x128x128xbf16>
    tpu.vector_store %arg4[%c0_4, %c0_5, %c0_6], %9 {strides = array<i32>} : memref<1x128x128xbf16, #tpu.memory_space<vmem>>, vector<1x128x128xbf16>,
    return
  }
  func.func @transform_0(%arg0: i32, %arg1: i32) -> (i32, i32, i32) {
    %c0_i32 = arith.constant 0 : i32
    %c0_i32_0 = arith.constant 0 : i32
    return %arg0, %arg1, %c0_i32 : i32, i32, i32
  }
  func.func @transform_1(%arg0: i32, %arg1: i32) -> (i32, i32) {
    %c0_i32 = arith.constant 0 : i32
    %c0_i32_0 = arith.constant 0 : i32
    %c0_i32_1 = arith.constant 0 : i32
    return %c0_i32, %c0_i32_0 : i32, i32
  }
  func.func @transform_2(%arg0: i32, %arg1: i32) -> (i32, i32, i32) {
    %c0_i32 = arith.constant 0 : i32
    %c0_i32_0 = arith.constant 0 : i32
    return %arg0, %arg1, %c0_i32 : i32, i32, i32
  }
}

module attributes {stable_mosaic.version = 11 : i64} {
  func.func @_support_kernel(%arg0: i32, %arg1: i32, %arg2: memref<1x128x128xf32, #tpu.memory_space<vmem>>, %arg3: memref<128x128xf32, #tpu.memory_space<vmem>>, %arg4: memref<1x128x128xbf16, #tpu.memory_space<vmem>>) attributes {dimension_semantics = [#tpu.dimension_semantics<parallel>, #tpu.dimension_semantics<parallel>], iteration_bounds = array<i64: 2, 1>, scalar_prefetch = 0 : i64, scratch_operands = 0 : i64, tpu.core_type = #tpu.core_type<tc>, window_params = [{transform_indices = @transform_0, window_bounds = array<i64: 1, 128, 128>}, {pipeline_mode = #tpu.pipeline_mode<synchronous>, transform_indices = @transform_1, window_bounds = array<i64: 128, 128>}, {transform_indices = @transform_2, window_bounds = array<i64: 1, 128, 128>}]} {
    %c0 = arith.constant 0 : index
    %c0_0 = arith.constant 0 : index
    %c0_1 = arith.constant 0 : index
    %0 = vector.load %arg2[%c0, %c0_0, %c0_1] : memref<1x128x128xf32, #tpu.memory_space<vmem>>, vector<1x128x128xf32>
    %1 = vector.shape_cast %0 : vector<1x128x128xf32> to vector<128x128xf32>
    %2 = arith.truncf %1 : vector<128x128xf32> to vector<128x128xbf16>
    %c0_2 = arith.constant 0 : index
    %c0_3 = arith.constant 0 : index
    %3 = vector.load %arg3[%c0_2, %c0_3] : memref<128x128xf32, #tpu.memory_space<vmem>>, vector<128x128xf32>
    %4 = arith.truncf %3 : vector<128x128xf32> to vector<128x128xbf16>
    %cst = arith.constant dense<0.000000e+00> : vector<128x128xf32>
    %5 = tpu.matmul %2, %4, %cst {dimension_numbers = #tpu.dot_dimension_numbers<[1], [0], [0], [1], [0, 0, 1, 1], [], []>} : vector<128x128xbf16>, vector<128x128xbf16>, vector<128x128xf32> -> vector<128x128xf32>
    %6 = arith.truncf %5 : vector<128x128xf32> to vector<128x128xbf16>
    %c0_4 = arith.constant 0 : index
    %c0_5 = arith.constant 0 : index
    %c0_6 = arith.constant 0 : index
    %7 = vector.load %arg4[%c0_4, %c0_5, %c0_6] : memref<1x128x128xbf16, #tpu.memory_space<vmem>>, vector<1x128x128xbf16>
    %8 = vector.shape_cast %7 : vector<1x128x128xbf16> to vector<128x128xbf16>
    %9 = vector.shape_cast %6 : vector<128x128xbf16> to vector<1x128x128xbf16>
    tpu.vector_store %arg4[%c0_4, %c0_5, %c0_6], %9 {strides = array<i32>} : memref<1x128x128xbf16, #tpu.memory_space<vmem>>, vector<1x128x128xbf16>,
    return
  }
  func.func @transform_0(%arg0: i32, %arg1: i32) -> (i32, i32, i32) {
    %c0_i32 = arith.constant 0 : i32
    %c0_i32_0 = arith.constant 0 : i32
    return %arg0, %arg1, %c0_i32 : i32, i32, i32
  }
  func.func @transform_1(%arg0: i32, %arg1: i32) -> (i32, i32) {
    %c0_i32 = arith.constant 0 : i32
    %c0_i32_0 = arith.constant 0 : i32
    %c0_i32_1 = arith.constant 0 : i32
    return %c0_i32, %c0_i32_0 : i32, i32
  }
  func.func @transform_2(%arg0: i32, %arg1: i32) -> (i32, i32, i32) {
    %c0_i32 = arith.constant 0 : i32
    %c0_i32_0 = arith.constant 0 : i32
    return %arg0, %arg1, %c0_i32 : i32, i32, i32
  }
}

</mosaic_0001>

<llo_original>
// kernel: tpu_custom_call.1
$region0: #{tpu_custom_call.1}
  #allocation0 [shape = 'u32[]', space=smem, size = 0x4, offset = 0x4, fixed_abs, tag = 'smem constant byte address 0x4 - core index']
  #allocation1 [shape = 'u32[144,128]{1,0:T(1,128)}', space=vmem, size = 0x12000, scoped, tag = 'internal scratch']
  %s0 = inlined_call_operand.hbm [shape: f32[2,128,128], index: 0, kind: input, shape index: {}]
  %s1 = inlined_call_operand.hbm [shape: f32[128,128], index: 1, kind: input, shape index: {}]
  %s2 = inlined_call_operand.hbm [shape: bf16[2,128,128], index: 2, kind: output, shape index: {}]
  %s3 = sld [smem:[#allocation0]]
  $region49: #{tpu_custom_call.1} parent=0
    _
  %s5 = ssub.s32 1, %s3
  %s6 = scalar_select 0, %s5, %s3
  $region1: #{tpu_custom_call.1} parent=0
    #allocation2 [shape = 'u8[131072]{0}', space=vmem, size = 0x20000, scoped, tag = 'input window, operand 0']
    #allocation3 [shape = 's32[2]{0}', space=sflag, size = 0x8, scoped, tag = 'scoped memory for tpu_custom_call.1']
    #allocation4 [shape = 's32[2]{0}', space=sflag, size = 0x8, scoped, tag = 'scoped memory for tpu_custom_call.1']
    #allocation5 [shape = 'u8[65536]{0}', space=vmem, size = 0x10000, scoped, tag = 'input window, operand 1, single buffered']
    #allocation6 [shape = 's32[1]{0}', space=sflag, size = 0x4, scoped, tag = 'scoped memory for tpu_custom_call.1']
    #allocation7 [shape = 'u8[65536]{0}', space=vmem, size = 0x10000, scoped, tag = 'output window, operand 0']
    %7 = vsyncpa [#allocation3], 0
    %s8 = scalar_lea.sflag [#allocation3], 1
    %9 = vsyncpa %s8, 0
    %10 = vsyncpa [#allocation6], 0
    %11 = vsyncpa [#allocation4], 0
    %s12 = scalar_lea.sflag [#allocation4], 1
    %13 = vsyncpa %s12, 0
    loop: start=0, step=1, limit=4
    $region2: #{tpu_custom_call.1} parent=1 // loop_pre_header
      _
    $region3: #{tpu_custom_call.1} parent=1 // loop_header
      %s15 = sphi 0, %s19
      %p16 = scmp.ge.s32.totalorder %s15, 4
      %s22 = sphi 0, %s34
      %s23 = sphi 0, %s30
      %s24 = sphi 0, %s22
      %s25 = sphi 0, %s23
      %s26 = sphi 0, %s24
      %s27 = sphi 0, %s25
      %s39 = sphi 0, %s41
      %s42 = sphi 0, %s39
      %s43 = sphi 0, %s42
      %s59 = sphi 0, %s43
      %s63 = sphi 0, %s63
      %s65 = sphi 0, %s63
      %s66 = sphi 0, %s65
      %s80 = sphi 0, %s66
      %s88 = sphi 0, %s90
      %s91 = sphi 0, %s88
      %s92 = sphi 0, %s91
      %s108 = sphi 0, %s92
    $region4: #{tpu_custom_call.1} parent=1 // loop_header_branch
      %18 = sbr.rel (%p16) target = $region8
    $region5: #{tpu_custom_call.1} parent=1 // loop_body
      %s20 = ssub.s32 %s15, 1
      %s21 = ssub.s32 %s15, 2
      %s28 = sadd.s32 1, %s23
      %p29 = scmp.ge.s32.totalorder %s28, 1
      %s30 = scalar_select %p29, 0, %s28
      %s31 = sadd.s32 1, %s22
      %s32 = scalar_select %p29, %s31, %s22
      %p33 = scmp.ge.s32.totalorder %s32, 2
      %s34 = scalar_select %p33, 0, %s32
      %s35 = ssub.s32 %s22, %s34
      %s36 = ssub.s32 %s23, %s30
      %s37 = sor.u32 %s35, %s36
      %p38 = scmp.eq.s32.totalorder %s37, 0
      %s40 = sadd.s32 %s39, 1
      %s41 = scalar_select %p38, %s39, %s40
      %p44 = pneg %p38
      %p45 = scmp.eq.s32.totalorder %s15, 1
      %p46 = por %p44, %p45
      %p47 = scmp.ne.s32.totalorder %s39, %s42
      %p48 = scmp.eq.s32.totalorder %s15, 0
      %p49 = por %p47, %p48
      %p50 = scmp.ne.s32.totalorder %s39, %s42
      %p51 = scmp.eq.s32.totalorder %s20, 1
      %p52 = por %p50, %p51
      %p53 = scmp.ne.s32.totalorder %s42, %s43
      %p54 = scmp.eq.s32.totalorder %s20, 0
      %p55 = por %p53, %p54
      %p56 = scmp.ne.s32.totalorder %s42, %s43
      %p57 = scmp.eq.s32.totalorder %s21, 1
      %p58 = por %p56, %p57
      %p60 = scmp.ne.s32.totalorder %s43, %s59
      %p61 = scmp.eq.s32.totalorder %s21, 0
      %p62 = por %p60, %p61
      %s64 = sadd.s32 %s63, 1
      %p67 = scmp.eq.s32.totalorder %s15, 1
      %p68 = scmp.ne.s32.totalorder %s63, %s65
      %p69 = scmp.eq.s32.totalorder %s15, 0
      %p70 = por %p68, %p69
      %p71 = scmp.ne.s32.totalorder %s63, %s65
      %p72 = scmp.eq.s32.totalorder %s20, 1
      %p73 = por %p71, %p72
      %p74 = scmp.ne.s32.totalorder %s65, %s66
      %p75 = scmp.eq.s32.totalorder %s20, 0
      %p76 = por %p74, %p75
      %p77 = scmp.ne.s32.totalorder %s65, %s66
      %p78 = scmp.eq.s32.totalorder %s21, 1
      %p79 = por %p77, %p78
      %p81 = scmp.ne.s32.totalorder %s66, %s80
      %p82 = scmp.eq.s32.totalorder %s21, 0
      %p83 = por %p81, %p82
      %s84 = ssub.s32 %s22, %s34
      %s85 = ssub.s32 %s23, %s30
      %s86 = sor.u32 %s84, %s85
      %p87 = scmp.eq.s32.totalorder %s86, 0
      %s89 = sadd.s32 %s88, 1
      %s90 = scalar_select %p87, %s88, %s89
      %p93 = pneg %p87
      %p94 = scmp.eq.s32.totalorder %s15, 1
      %p95 = por %p93, %p94
      %p96 = scmp.ne.s32.totalorder %s88, %s91
      %p97 = scmp.eq.s32.totalorder %s15, 0
      %p98 = por %p96, %p97
      %p99 = scmp.ne.s32.totalorder %s88, %s91
      %p100 = scmp.eq.s32.totalorder %s20, 1
      %p101 = por %p99, %p100
      %p102 = scmp.ne.s32.totalorder %s91, %s92
      %p103 = scmp.eq.s32.totalorder %s20, 0
      %p104 = por %p102, %p103
      %p105 = scmp.ne.s32.totalorder %s91, %s92
      %p106 = scmp.eq.s32.totalorder %s21, 1
      %p107 = por %p105, %p106
      %p109 = scmp.ne.s32.totalorder %s92, %s108
      %p110 = scmp.eq.s32.totalorder %s21, 0
      %p111 = por %p109, %p110
      %p112 = scmp.le.s32.totalorder 1, %s15
      %p113 = scmp.lt.s32.totalorder %s15, 3
      %p114 = pnand %p112, %p113
      %p115 = pneg %p114
      // Predicated region
      $region9: #{tpu_custom_call.1} parent=5 // pred_check
        _
      $region10: #{tpu_custom_call.1} parent=5 // pred_check_branch
        %117 = sbr.rel (%p114) target = $region12
      $region11: #{tpu_custom_call.1} parent=5 // pred_region
        %s118 = ssub.s32 %s15, 1
        // Predicated region
        $region13: #{tpu_custom_call.1} parent=11 // pred_check
          %p119 = pneg %p76
        $region14: #{tpu_custom_call.1} parent=11 // pred_check_branch
          %121 = sbr.rel (%p119) target = $region16
        $region15: #{tpu_custom_call.1} parent=11 // pred_region
          %s123 = ssub.s32 2048, 2048
          %124 = vsyncadd [#allocation6], %s123
          %s125 = sshll.u32 [#allocation5], 4
          %s126 = int_to_ptr.vmem [resolvable:$true] %s125
          %131 = dma.hbm_to_vmem [thread:$0]  %s1, 2048, %s126, [#allocation6], 128, 128, 8
        $region16: #{tpu_custom_call.1} parent=11 // pred_fallthru
          _
      $region12: #{tpu_custom_call.1} parent=5 // pred_fallthru
        _
      %p132 = scmp.lt.s32.totalorder %s15, 2
      // Predicated region
      $region17: #{tpu_custom_call.1} parent=5 // pred_check
        %p133 = pneg %p132
      $region18: #{tpu_custom_call.1} parent=5 // pred_check_branch
        %135 = sbr.rel (%p133) target = $region20
      $region19: #{tpu_custom_call.1} parent=5 // pred_region
        // Predicated region
        $region21: #{tpu_custom_call.1} parent=19 // pred_check
          %p136 = pneg %p49
        $region22: #{tpu_custom_call.1} parent=19 // pred_check_branch
          %138 = sbr.rel (%p136) target = $region24
        $region23: #{tpu_custom_call.1} parent=19 // pred_region
          %s139 = sand.u32 %s39, 1
          %s140 = scalar_lea.sflag [#allocation3], %s139
          %s141 = sand.u32 %s39, 1
          %s142 = smul.addr %s141, 128
          %s143 = scalar_lea.vmem [#allocation2], %s142
          %s144 = smul.u32 16, %s23
          %s146 = ssub.s32 2048, 2048
          %147 = vsyncadd %s140, %s146
          %s148 = smul.addr %s22, 16
          %s149 = sadd.s32 %s144, %s148
          %s150 = smul.addr %s149, 128
          %s151 = scalar_lea.hbm %s0, %s150
          %s152 = sshll.u32 %s143, 4
          %s153 = int_to_ptr.vmem [resolvable:$true] %s152
          %158 = dma.hbm_to_vmem [thread:$0]  %s151, 2048, %s153, %s140, 128, 128, 8
        $region24: #{tpu_custom_call.1} parent=19 // pred_fallthru
          _
      $region20: #{tpu_custom_call.1} parent=5 // pred_fallthru
        _
      %p159 = scmp.le.s32.totalorder 1, %s15
      %p160 = scmp.lt.s32.totalorder %s15, 3
      %p161 = pnand %p159, %p160
      %p162 = pneg %p161
      // Predicated region
      $region25: #{tpu_custom_call.1} parent=5 // pred_check
        _
      $region26: #{tpu_custom_call.1} parent=5 // pred_check_branch
        %164 = sbr.rel (%p161) target = $region28
      $region27: #{tpu_custom_call.1} parent=5 // pred_region
        %s165 = ssub.s32 %s15, 1
        %s166 = sand.u32 %s42, 1
        %s167 = scalar_lea.sflag [#allocation3], %s166
        %s168 = sand.u32 %s42, 1
        %s169 = smul.addr %s168, 128
        %s170 = scalar_lea.vmem [#allocation2], %s169
        // Predicated region
        $region29: #{tpu_custom_call.1} parent=27 // pred_check
          %p171 = pneg %p55
        $region30: #{tpu_custom_call.1} parent=27 // pred_check_branch
          %173 = sbr.rel (%p171) target = $region32
        $region31: #{tpu_custom_call.1} parent=27 // pred_region
          %174 = dma.done %s167, 2048
        $region32: #{tpu_custom_call.1} parent=27 // pred_fallthru
          _
        // Predicated region
        $region33: #{tpu_custom_call.1} parent=27 // pred_check
          %p175 = pneg %p76
        $region34: #{tpu_custom_call.1} parent=27 // pred_check_branch
          %177 = sbr.rel (%p175) target = $region36
        $region35: #{tpu_custom_call.1} parent=27 // pred_region
          %178 = dma.done [#allocation6], 2048
        $region36: #{tpu_custom_call.1} parent=27 // pred_fallthru
          _
        %s179 = sand.u32 %s42, 1
        %s180 = scalar_lea.sflag [#allocation3], %s179
        %s181 = sand.u32 %s42, 1
        %s182 = smul.addr %s181, 128
        %s183 = scalar_lea.vmem [#allocation2], %s182
        %p184 = pneg %p55
        %p185 = pneg %p52
        %p186 = pneg %p76
        %p187 = pneg %p73
        %p188 = pneg %p104
        %p189 = pneg %p101
        %s190 = sand.u32 %s91, 1
        %s191 = scalar_lea.sflag [#allocation4], %s190
        %s192 = sand.u32 %s91, 1
        %s193 = smul.addr %s192, 64
        %s194 = scalar_lea.vmem [#allocation7], %s193
        %s195 = smul.u32 16, %s25
        %s196 = smul.u32 16, %s25
        %v198 = vld [vmem:[%s170] sm:$0xff]
        %v199 = vld [vmem:[%s170 + $0x8] sm:$0xff]
        %v200 = vld [vmem:[%s170 + $0x10] sm:$0xff]
        %v201 = vld [vmem:[%s170 + $0x18] sm:$0xff]
        %v202 = vld [vmem:[%s170 + $0x20] sm:$0xff]
        %v203 = vld [vmem:[%s170 + $0x28] sm:$0xff]
        %v204 = vld [vmem:[%s170 + $0x30] sm:$0xff]
        %v205 = vld [vmem:[%s170 + $0x38] sm:$0xff]
        %v206 = vld [vmem:[%s170 + $0x40] sm:$0xff]
        %v207 = vld [vmem:[%s170 + $0x48] sm:$0xff]
        %v208 = vld [vmem:[%s170 + $0x50] sm:$0xff]
        %v209 = vld [vmem:[%s170 + $0x58] sm:$0xff]
        %v210 = vld [vmem:[%s170 + $0x60] sm:$0xff]
        %v211 = vld [vmem:[%s170 + $0x68] sm:$0xff]
        %v212 = vld [vmem:[%s170 + $0x70] sm:$0xff]
        %v213 = vld [vmem:[%s170 + $0x78] sm:$0xff]
        %v214 = vpack.c.bf16 %v199, %v198
        %v215 = vpack.c.bf16 %v201, %v200
        %v216 = vpack.c.bf16 %v203, %v202
        %v217 = vpack.c.bf16 %v205, %v204
        %v218 = vpack.c.bf16 %v207, %v206
        %v219 = vpack.c.bf16 %v209, %v208
        %v220 = vpack.c.bf16 %v211, %v210
        %v221 = vpack.c.bf16 %v213, %v212
        %v222 = vld [vmem:[#allocation5] sm:$0xff]
        %v223 = vld [vmem:[#allocation5 + $0x8] sm:$0xff]
        %v224 = vld [vmem:[#allocation5 + $0x10] sm:$0xff]
        %v225 = vld [vmem:[#allocation5 + $0x18] sm:$0xff]
        %v226 = vld [vmem:[#allocation5 + $0x20] sm:$0xff]
        %v227 = vld [vmem:[#allocation5 + $0x28] sm:$0xff]
        %v228 = vld [vmem:[#allocation5 + $0x30] sm:$0xff]
        %v229 = vld [vmem:[#allocation5 + $0x38] sm:$0xff]
        %v230 = vld [vmem:[#allocation5 + $0x40] sm:$0xff]
        %v231 = vld [vmem:[#allocation5 + $0x48] sm:$0xff]
        %v232 = vld [vmem:[#allocation5 + $0x50] sm:$0xff]
        %v233 = vld [vmem:[#allocation5 + $0x58] sm:$0xff]
        %v234 = vld [vmem:[#allocation5 + $0x60] sm:$0xff]
        %v235 = vld [vmem:[#allocation5 + $0x68] sm:$0xff]
        %v236 = vld [vmem:[#allocation5 + $0x70] sm:$0xff]
        %v237 = vld [vmem:[#allocation5 + $0x78] sm:$0xff]
        %v238 = vpack.c.bf16 %v223, %v222
        %v239 = vpack.c.bf16 %v225, %v224
        %v240 = vpack.c.bf16 %v227, %v226
        %v241 = vpack.c.bf16 %v229, %v228
        %v242 = vpack.c.bf16 %v231, %v230
        %v243 = vpack.c.bf16 %v233, %v232
        %v244 = vpack.c.bf16 %v235, %v234
        %v245 = vpack.c.bf16 %v237, %v236
        %246 = vmatprep.subr.bf16.mxu0 0
        %247 = vmatpush1.bf16.msra.mxu0 %v238
        %248 = vmatprep.subr.bf16.mxu0 0
        %249 = vmatpush1.bf16.msra.mxu0 %v239
        %250 = vmatprep.subr.bf16.mxu0 0
        %251 = vmatpush1.bf16.msra.mxu0 %v240
        %252 = vmatprep.subr.bf16.mxu0 0
        %253 = vmatpush1.bf16.msra.mxu0 %v241
        %254 = vmatprep.subr.bf16.mxu0 0
        %255 = vmatpush1.bf16.msra.mxu0 %v242
        %256 = vmatprep.subr.bf16.mxu0 0
        %257 = vmatpush1.bf16.msra.mxu0 %v243
        %258 = vmatprep.subr.bf16.mxu0 0
        %259 = vmatpush1.bf16.msra.mxu0 %v244
        %260 = vmatprep.subr.bf16.mxu0 0
        %261 = vmatpush1.bf16.msra.mxu0 %v245
        %262 = vmatprep.subr.bf16.mxu0 0
        %263 = vmatpush1.bf16.msra.mxu0 0
        %264 = vmatprep.subr.bf16.mxu0 0
        %265 = vmatpush1.bf16.msra.mxu0 0
        %266 = vmatprep.subr.bf16.mxu0 0
        %267 = vmatpush1.bf16.msra.mxu0 0
        %268 = vmatprep.subr.bf16.mxu0 0
        %269 = vmatpush1.bf16.msra.mxu0 0
        %270 = vmatprep.subr.bf16.mxu0 0
        %271 = vmatpush1.bf16.msra.mxu0 0
        %272 = vmatprep.subr.bf16.mxu0 0
        %273 = vmatpush1.bf16.msra.mxu0 0
        %274 = vmatprep.subr.bf16.mxu0 0
        %275 = vmatpush1.bf16.msra.mxu0 0
        %276 = vmatprep.subr.bf16.mxu0 0
        %277 = vmatpush1.bf16.msra.mxu0 0
        %278 = vmatprep.mubr.bf16.mxu0 0
        %279 = vmatmul.mubr.bf16.gmra.mrb[0].mxu0 %v214
        %v280 = vpop.f32.mrb[0].mxu0
        %v281 = vadd.f32 0.0, %v280
        %v282 = vpop.f32.mrb[0].mxu0
        %v283 = vpop.f32.mrb[0].mxu0
        %v284 = vadd.f32 0.0, %v283
        %v285 = vpop.f32.mrb[0].mxu0
        %286 = vmatprep.mubr.bf16.mxu0 0
        %287 = vmatmul.mubr.bf16.gmra.mrb[0].mxu0 %v215
        %v288 = vpop.f32.mrb[0].mxu0
        %v289 = vadd.f32 0.0, %v288
        %v290 = vpop.f32.mrb[0].mxu0
        %v291 = vpop.f32.mrb[0].mxu0
        %v292 = vadd.f32 0.0, %v291
        %v293 = vpop.f32.mrb[0].mxu0
        %294 = vmatprep.mubr.bf16.mxu0 0
        %295 = vmatmul.mubr.bf16.gmra.mrb[0].mxu0 %v216
        %v296 = vpop.f32.mrb[0].mxu0
        %v297 = vadd.f32 0.0, %v296
        %v298 = vpop.f32.mrb[0].mxu0
        %v299 = vpop.f32.mrb[0].mxu0
        %v300 = vadd.f32 0.0, %v299
        %v301 = vpop.f32.mrb[0].mxu0
        %302 = vmatprep.mubr.bf16.mxu0 0
        %303 = vmatmul.mubr.bf16.gmra.mrb[0].mxu0 %v217
        %v304 = vpop.f32.mrb[0].mxu0
        %v305 = vadd.f32 0.0, %v304
        %v306 = vpop.f32.mrb[0].mxu0
        %v307 = vpop.f32.mrb[0].mxu0
        %v308 = vadd.f32 0.0, %v307
        %v309 = vpop.f32.mrb[0].mxu0
        %310 = vmatprep.mubr.bf16.mxu0 0
        %311 = vmatmul.mubr.bf16.gmra.mrb[0].mxu0 %v218
        %v312 = vpop.f32.mrb[0].mxu0
        %v313 = vadd.f32 0.0, %v312
        %v314 = vpop.f32.mrb[0].mxu0
        %v315 = vpop.f32.mrb[0].mxu0
        %v316 = vadd.f32 0.0, %v315
        %v317 = vpop.f32.mrb[0].mxu0
        %318 = vmatprep.mubr.bf16.mxu0 0
        %319 = vmatmul.mubr.bf16.gmra.mrb[0].mxu0 %v219
        %v320 = vpop.f32.mrb[0].mxu0
        %v321 = vadd.f32 0.0, %v320
        %v322 = vpop.f32.mrb[0].mxu0
        %v323 = vpop.f32.mrb[0].mxu0
        %v324 = vadd.f32 0.0, %v323
        %v325 = vpop.f32.mrb[0].mxu0
        %326 = vmatprep.mubr.bf16.mxu0 0
        %327 = vmatmul.mubr.bf16.gmra.mrb[0].mxu0 %v220
        %v328 = vpop.f32.mrb[0].mxu0
        %v329 = vadd.f32 0.0, %v328
        %v330 = vpop.f32.mrb[0].mxu0
        %v331 = vpop.f32.mrb[0].mxu0
        %v332 = vadd.f32 0.0, %v331
        %v333 = vpop.f32.mrb[0].mxu0
        %334 = vmatprep.mubr.bf16.mxu0 0
        %335 = vmatmul.mubr.bf16.gmra.mrb[0].mxu0 %v221
        %v336 = vpop.f32.mrb[0].mxu0
        %v337 = vadd.f32 0.0, %v336
        %v338 = vpop.f32.mrb[0].mxu0
        %v339 = vpop.f32.mrb[0].mxu0
        %v340 = vadd.f32 0.0, %v339
        %v341 = vpop.f32.mrb[0].mxu0
        %342 = vdwg.mxu0
        %v343 = vpack.c.bf16 %v284, %v281
        %v344 = vpack.c.bf16 %v292, %v289
        %v345 = vpack.c.bf16 %v300, %v297
        %v346 = vpack.c.bf16 %v308, %v305
        %v347 = vpack.c.bf16 %v316, %v313
        %v348 = vpack.c.bf16 %v324, %v321
        %v349 = vpack.c.bf16 %v332, %v329
        %v350 = vpack.c.bf16 %v340, %v337
        %v359 = vunpack.c.l.b16 %v343
        %v360 = vunpack.c.h.b16 %v343
        %v361 = vunpack.c.l.b16 %v344
        %v362 = vunpack.c.h.b16 %v344
        %v363 = vunpack.c.l.b16 %v345
        %v364 = vunpack.c.h.b16 %v345
        %v365 = vunpack.c.l.b16 %v346
        %v366 = vunpack.c.h.b16 %v346
        %v367 = vunpack.c.l.b16 %v347
        %v368 = vunpack.c.h.b16 %v347
        %v369 = vunpack.c.l.b16 %v348
        %v370 = vunpack.c.h.b16 %v348
        %v371 = vunpack.c.l.b16 %v349
        %v372 = vunpack.c.h.b16 %v349
        %v373 = vunpack.c.l.b16 %v350
        %v374 = vunpack.c.h.b16 %v350
        %v375 = vpack.c.b16 %v359, %v359
        %v376 = vpack.c.b16 %v360, %v360
        %v377 = vpack.c.b16 %v361, %v361
        %v378 = vpack.c.b16 %v362, %v362
        %v379 = vpack.c.b16 %v363, %v363
        %v380 = vpack.c.b16 %v364, %v364
        %v381 = vpack.c.b16 %v365, %v365
        %v382 = vpack.c.b16 %v366, %v366
        %v383 = vpack.c.b16 %v367, %v367
        %v384 = vpack.c.b16 %v368, %v368
        %v385 = vpack.c.b16 %v369, %v369
        %v386 = vpack.c.b16 %v370, %v370
        %v387 = vpack.c.b16 %v371, %v371
        %v388 = vpack.c.b16 %v372, %v372
        %v389 = vpack.c.b16 %v373, %v373
        %v390 = vpack.c.b16 %v374, %v374
        %407 = vst [vmem:[%s194] sm:$0xf] %v375
        %408 = vst [vmem:[%s194 + $0x4] sm:$0xf] %v376
        %409 = vst [vmem:[%s194 + $0x8] sm:$0xf] %v377
        %410 = vst [vmem:[%s194 + $0xc] sm:$0xf] %v378
        %411 = vst [vmem:[%s194 + $0x10] sm:$0xf] %v379
        %412 = vst [vmem:[%s194 + $0x14] sm:$0xf] %v380
        %413 = vst [vmem:[%s194 + $0x18] sm:$0xf] %v381
        %414 = vst [vmem:[%s194 + $0x1c] sm:$0xf] %v382
        %415 = vst [vmem:[%s194 + $0x20] sm:$0xf] %v383
        %416 = vst [vmem:[%s194 + $0x24] sm:$0xf] %v384
        %417 = vst [vmem:[%s194 + $0x28] sm:$0xf] %v385
        %418 = vst [vmem:[%s194 + $0x2c] sm:$0xf] %v386
        %419 = vst [vmem:[%s194 + $0x30] sm:$0xf] %v387
        %420 = vst [vmem:[%s194 + $0x34] sm:$0xf] %v388
        %421 = vst [vmem:[%s194 + $0x38] sm:$0xf] %v389
        %422 = vst [vmem:[%s194 + $0x3c] sm:$0xf] %v390
        %s423 = sand.u32 %s91, 1
        %s424 = scalar_lea.sflag [#allocation4], %s423
        %s425 = sand.u32 %s91, 1
        %s426 = smul.addr %s425, 64
        %s427 = scalar_lea.vmem [#allocation7], %s426
        // Predicated region
        $region37: #{tpu_custom_call.1} parent=27 // pred_check
          %p428 = pneg %p101
        $region38: #{tpu_custom_call.1} parent=27 // pred_check_branch
          %430 = sbr.rel (%p428) target = $region40
        $region39: #{tpu_custom_call.1} parent=27 // pred_region
          %s431 = smul.u32 16, %s25
          %s433 = ssub.s32 1024, 1024
          %434 = vsyncadd %s424, %s433
          %s435 = smul.addr %s24, 16
          %s436 = sadd.s32 %s431, %s435
          %s437 = smul.addr %s436, 64
          %s438 = scalar_lea.hbm %s2, %s437
          %s439 = sshll.u32 %s427, 4
          %s440 = int_to_ptr.vmem [resolvable:$true] %s439
          %445 = dma.vmem_to_hbm [thread:$0]  %s440, 1024, %s438, %s424, 64, 64, 4
        $region40: #{tpu_custom_call.1} parent=27 // pred_fallthru
          _
      $region28: #{tpu_custom_call.1} parent=5 // pred_fallthru
        _
      %p446 = scmp.le.s32.totalorder 2, %s15
      // Predicated region
      $region41: #{tpu_custom_call.1} parent=5 // pred_check
        %p447 = pneg %p446
      $region42: #{tpu_custom_call.1} parent=5 // pred_check_branch
        %449 = sbr.rel (%p447) target = $region44
      $region43: #{tpu_custom_call.1} parent=5 // pred_region
        %s450 = ssub.s32 %s15, 2
        // Predicated region
        $region45: #{tpu_custom_call.1} parent=43 // pred_check
          %p451 = pneg %p107
        $region46: #{tpu_custom_call.1} parent=43 // pred_check_branch
          %453 = sbr.rel (%p451) target = $region48
        $region47: #{tpu_custom_call.1} parent=43 // pred_region
          %s454 = sand.u32 %s92, 1
          %s455 = scalar_lea.sflag [#allocation4], %s454
          %s456 = sand.u32 %s92, 1
          %s457 = smul.addr %s456, 64
          %s458 = scalar_lea.vmem [#allocation7], %s457
          %459 = dma.done %s455, 1024
        $region48: #{tpu_custom_call.1} parent=43 // pred_fallthru
          _
      $region44: #{tpu_custom_call.1} parent=5 // pred_fallthru
        _
    $region6: #{tpu_custom_call.1} parent=1 // loop_footer
      %s19 = sadd.s32 1, %s15
    $region7: #{tpu_custom_call.1} parent=1 // loop_footer_branch
      %14 = sbr.rel target = $region3
    $region8: #{tpu_custom_call.1} parent=1 // loop_exit
      _
    %460 = vsyncpa [#allocation3], 1
    %s461 = scalar_lea.sflag [#allocation3], 1
    %462 = vsyncpa %s461, 1
    %463 = vsyncpa [#allocation6], 1
    %464 = vsyncpa [#allocation4], 1
    %s465 = scalar_lea.sflag [#allocation4], 1
    %466 = vsyncpa %s465, 1

// kernel: tpu_custom_call.1
$region0: #{tpu_custom_call.1}
  #allocation0 [shape = 'u32[]', space=smem, size = 0x4, offset = 0x4, fixed_abs, tag = 'smem constant byte address 0x4 - core index']
  #allocation1 [shape = 'u32[144,128]{1,0:T(1,128)}', space=vmem, size = 0x12000, scoped, tag = 'internal scratch']
  %s0 = inlined_call_operand.hbm [shape: f32[2,128,128], index: 0, kind: input, shape index: {}]
  %s1 = inlined_call_operand.hbm [shape: f32[128,128], index: 1, kind: input, shape index: {}]
  %s2 = inlined_call_operand.hbm [shape: bf16[2,128,128], index: 2, kind: output, shape index: {}]
  %s3 = sld [smem:[#allocation0]]
  $region49: #{tpu_custom_call.1} parent=0
    _
  %s5 = ssub.s32 1, %s3
  %s6 = scalar_select 0, %s5, %s3
  $region1: #{tpu_custom_call.1} parent=0
    #allocation2 [shape = 'u8[131072]{0}', space=vmem, size = 0x20000, scoped, tag = 'input window, operand 0']
    #allocation3 [shape = 's32[2]{0}', space=sflag, size = 0x8, scoped, tag = 'scoped memory for tpu_custom_call.1']
    #allocation4 [shape = 's32[2]{0}', space=sflag, size = 0x8, scoped, tag = 'scoped memory for tpu_custom_call.1']
    #allocation5 [shape = 'u8[65536]{0}', space=vmem, size = 0x10000, scoped, tag = 'input window, operand 1, single buffered']
    #allocation6 [shape = 's32[1]{0}', space=sflag, size = 0x4, scoped, tag = 'scoped memory for tpu_custom_call.1']
    #allocation7 [shape = 'u8[65536]{0}', space=vmem, size = 0x10000, scoped, tag = 'output window, operand 0']
    %7 = vsyncpa [#allocation3], 0
    %s8 = scalar_lea.sflag [#allocation3], 1
    %9 = vsyncpa %s8, 0
    %10 = vsyncpa [#allocation6], 0
    %11 = vsyncpa [#allocation4], 0
    %s12 = scalar_lea.sflag [#allocation4], 1
    %13 = vsyncpa %s12, 0
    loop: start=0, step=1, limit=4
    $region2: #{tpu_custom_call.1} parent=1 // loop_pre_header
      _
    $region3: #{tpu_custom_call.1} parent=1 // loop_header
      %s15 = sphi 0, %s19
      %p16 = scmp.ge.s32.totalorder %s15, 4
      %s22 = sphi 0, %s34
      %s23 = sphi 0, %s30
      %s24 = sphi 0, %s22
      %s25 = sphi 0, %s23
      %s26 = sphi 0, %s24
      %s27 = sphi 0, %s25
      %s39 = sphi 0, %s41
      %s42 = sphi 0, %s39
      %s43 = sphi 0, %s42
      %s59 = sphi 0, %s43
      %s63 = sphi 0, %s63
      %s65 = sphi 0, %s63
      %s66 = sphi 0, %s65
      %s80 = sphi 0, %s66
      %s88 = sphi 0, %s90
      %s91 = sphi 0, %s88
      %s92 = sphi 0, %s91
      %s108 = sphi 0, %s92
    $region4: #{tpu_custom_call.1} parent=1 // loop_header_branch
      %18 = sbr.rel (%p16) target = $region8
    $region5: #{tpu_custom_call.1} parent=1 // loop_body
      %s20 = ssub.s32 %s15, 1
      %s21 = ssub.s32 %s15, 2
      %s28 = sadd.s32 1, %s23
      %p29 = scmp.ge.s32.totalorder %s28, 1
      %s30 = scalar_select %p29, 0, %s28
      %s31 = sadd.s32 1, %s22
      %s32 = scalar_select %p29, %s31, %s22
      %p33 = scmp.ge.s32.totalorder %s32, 2
      %s34 = scalar_select %p33, 0, %s32
      %s35 = ssub.s32 %s22, %s34
      %s36 = ssub.s32 %s23, %s30
      %s37 = sor.u32 %s35, %s36
      %p38 = scmp.eq.s32.totalorder %s37, 0
      %s40 = sadd.s32 %s39, 1
      %s41 = scalar_select %p38, %s39, %s40
      %p44 = pneg %p38
      %p45 = scmp.eq.s32.totalorder %s15, 1
      %p46 = por %p44, %p45
      %p47 = scmp.ne.s32.totalorder %s39, %s42
      %p48 = scmp.eq.s32.totalorder %s15, 0
      %p49 = por %p47, %p48
      %p50 = scmp.ne.s32.totalorder %s39, %s42
      %p51 = scmp.eq.s32.totalorder %s20, 1
      %p52 = por %p50, %p51
      %p53 = scmp.ne.s32.totalorder %s42, %s43
      %p54 = scmp.eq.s32.totalorder %s20, 0
      %p55 = por %p53, %p54
      %p56 = scmp.ne.s32.totalorder %s42, %s43
      %p57 = scmp.eq.s32.totalorder %s21, 1
      %p58 = por %p56, %p57
      %p60 = scmp.ne.s32.totalorder %s43, %s59
      %p61 = scmp.eq.s32.totalorder %s21, 0
      %p62 = por %p60, %p61
      %s64 = sadd.s32 %s63, 1
      %p67 = scmp.eq.s32.totalorder %s15, 1
      %p68 = scmp.ne.s32.totalorder %s63, %s65
      %p69 = scmp.eq.s32.totalorder %s15, 0
      %p70 = por %p68, %p69
      %p71 = scmp.ne.s32.totalorder %s63, %s65
      %p72 = scmp.eq.s32.totalorder %s20, 1
      %p73 = por %p71, %p72
      %p74 = scmp.ne.s32.totalorder %s65, %s66
      %p75 = scmp.eq.s32.totalorder %s20, 0
      %p76 = por %p74, %p75
      %p77 = scmp.ne.s32.totalorder %s65, %s66
      %p78 = scmp.eq.s32.totalorder %s21, 1
      %p79 = por %p77, %p78
      %p81 = scmp.ne.s32.totalorder %s66, %s80
      %p82 = scmp.eq.s32.totalorder %s21, 0
      %p83 = por %p81, %p82
      %s84 = ssub.s32 %s22, %s34
      %s85 = ssub.s32 %s23, %s30
      %s86 = sor.u32 %s84, %s85
      %p87 = scmp.eq.s32.totalorder %s86, 0
      %s89 = sadd.s32 %s88, 1
      %s90 = scalar_select %p87, %s88, %s89
      %p93 = pneg %p87
      %p94 = scmp.eq.s32.totalorder %s15, 1
      %p95 = por %p93, %p94
      %p96 = scmp.ne.s32.totalorder %s88, %s91
      %p97 = scmp.eq.s32.totalorder %s15, 0
      %p98 = por %p96, %p97
      %p99 = scmp.ne.s32.totalorder %s88, %s91
      %p100 = scmp.eq.s32.totalorder %s20, 1
      %p101 = por %p99, %p100
      %p102 = scmp.ne.s32.totalorder %s91, %s92
      %p103 = scmp.eq.s32.totalorder %s20, 0
      %p104 = por %p102, %p103
      %p105 = scmp.ne.s32.totalorder %s91, %s92
      %p106 = scmp.eq.s32.totalorder %s21, 1
      %p107 = por %p105, %p106
      %p109 = scmp.ne.s32.totalorder %s92, %s108
      %p110 = scmp.eq.s32.totalorder %s21, 0
      %p111 = por %p109, %p110
      %p112 = scmp.le.s32.totalorder 1, %s15
      %p113 = scmp.lt.s32.totalorder %s15, 3
      %p114 = pnand %p112, %p113
      %p115 = pneg %p114
      // Predicated region
      $region9: #{tpu_custom_call.1} parent=5 // pred_check
        _
      $region10: #{tpu_custom_call.1} parent=5 // pred_check_branch
        %117 = sbr.rel (%p114) target = $region12
      $region11: #{tpu_custom_call.1} parent=5 // pred_region
        %s118 = ssub.s32 %s15, 1
        // Predicated region
        $region13: #{tpu_custom_call.1} parent=11 // pred_check
          %p119 = pneg %p76
        $region14: #{tpu_custom_call.1} parent=11 // pred_check_branch
          %121 = sbr.rel (%p119) target = $region16
        $region15: #{tpu_custom_call.1} parent=11 // pred_region
          %s123 = ssub.s32 2048, 2048
          %124 = vsyncadd [#allocation6], %s123
          %s125 = sshll.u32 [#allocation5], 4
          %s126 = int_to_ptr.vmem [resolvable:$true] %s125
          %131 = dma.hbm_to_vmem [thread:$0]  %s1, 2048, %s126, [#allocation6], 128, 128, 8
        $region16: #{tpu_custom_call.1} parent=11 // pred_fallthru
          _
      $region12: #{tpu_custom_call.1} parent=5 // pred_fallthru
        _
      %p132 = scmp.lt.s32.totalorder %s15, 2
      // Predicated region
      $region17: #{tpu_custom_call.1} parent=5 // pred_check
        %p133 = pneg %p132
      $region18: #{tpu_custom_call.1} parent=5 // pred_check_branch
        %135 = sbr.rel (%p133) target = $region20
      $region19: #{tpu_custom_call.1} parent=5 // pred_region
        // Predicated region
        $region21: #{tpu_custom_call.1} parent=19 // pred_check
          %p136 = pneg %p49
        $region22: #{tpu_custom_call.1} parent=19 // pred_check_branch
          %138 = sbr.rel (%p136) target = $region24
        $region23: #{tpu_custom_call.1} parent=19 // pred_region
          %s139 = sand.u32 %s39, 1
          %s140 = scalar_lea.sflag [#allocation3], %s139
          %s141 = sand.u32 %s39, 1
          %s142 = smul.addr %s141, 128
          %s143 = scalar_lea.vmem [#allocation2], %s142
          %s144 = smul.u32 16, %s23
          %s146 = ssub.s32 2048, 2048
          %147 = vsyncadd %s140, %s146
          %s148 = smul.addr %s22, 16
          %s149 = sadd.s32 %s144, %s148
          %s150 = smul.addr %s149, 128
          %s151 = scalar_lea.hbm %s0, %s150
          %s152 = sshll.u32 %s143, 4
          %s153 = int_to_ptr.vmem [resolvable:$true] %s152
          %158 = dma.hbm_to_vmem [thread:$0]  %s151, 2048, %s153, %s140, 128, 128, 8
        $region24: #{tpu_custom_call.1} parent=19 // pred_fallthru
          _
      $region20: #{tpu_custom_call.1} parent=5 // pred_fallthru
        _
      %p159 = scmp.le.s32.totalorder 1, %s15
      %p160 = scmp.lt.s32.totalorder %s15, 3
      %p161 = pnand %p159, %p160
      %p162 = pneg %p161
      // Predicated region
      $region25: #{tpu_custom_call.1} parent=5 // pred_check
        _
      $region26: #{tpu_custom_call.1} parent=5 // pred_check_branch
        %164 = sbr.rel (%p161) target = $region28
      $region27: #{tpu_custom_call.1} parent=5 // pred_region
        %s165 = ssub.s32 %s15, 1
        %s166 = sand.u32 %s42, 1
        %s167 = scalar_lea.sflag [#allocation3], %s166
        %s168 = sand.u32 %s42, 1
        %s169 = smul.addr %s168, 128
        %s170 = scalar_lea.vmem [#allocation2], %s169
        // Predicated region
        $region29: #{tpu_custom_call.1} parent=27 // pred_check
          %p171 = pneg %p55
        $region30: #{tpu_custom_call.1} parent=27 // pred_check_branch
          %173 = sbr.rel (%p171) target = $region32
        $region31: #{tpu_custom_call.1} parent=27 // pred_region
          %174 = dma.done %s167, 2048
        $region32: #{tpu_custom_call.1} parent=27 // pred_fallthru
          _
        // Predicated region
        $region33: #{tpu_custom_call.1} parent=27 // pred_check
          %p175 = pneg %p76
        $region34: #{tpu_custom_call.1} parent=27 // pred_check_branch
          %177 = sbr.rel (%p175) target = $region36
        $region35: #{tpu_custom_call.1} parent=27 // pred_region
          %178 = dma.done [#allocation6], 2048
        $region36: #{tpu_custom_call.1} parent=27 // pred_fallthru
          _
        %s179 = sand.u32 %s42, 1
        %s180 = scalar_lea.sflag [#allocation3], %s179
        %s181 = sand.u32 %s42, 1
        %s182 = smul.addr %s181, 128
        %s183 = scalar_lea.vmem [#allocation2], %s182
        %p184 = pneg %p55
        %p185 = pneg %p52
        %p186 = pneg %p76
        %p187 = pneg %p73
        %p188 = pneg %p104
        %p189 = pneg %p101
        %s190 = sand.u32 %s91, 1
        %s191 = scalar_lea.sflag [#allocation4], %s190
        %s192 = sand.u32 %s91, 1
        %s193 = smul.addr %s192, 64
        %s194 = scalar_lea.vmem [#allocation7], %s193
        %s195 = smul.u32 16, %s25
        %s196 = smul.u32 16, %s25
        %v198 = vld [vmem:[%s170] sm:$0xff]
        %v199 = vld [vmem:[%s170 + $0x8] sm:$0xff]
        %v200 = vld [vmem:[%s170 + $0x10] sm:$0xff]
        %v201 = vld [vmem:[%s170 + $0x18] sm:$0xff]
        %v202 = vld [vmem:[%s170 + $0x20] sm:$0xff]
        %v203 = vld [vmem:[%s170 + $0x28] sm:$0xff]
        %v204 = vld [vmem:[%s170 + $0x30] sm:$0xff]
        %v205 = vld [vmem:[%s170 + $0x38] sm:$0xff]
        %v206 = vld [vmem:[%s170 + $0x40] sm:$0xff]
        %v207 = vld [vmem:[%s170 + $0x48] sm:$0xff]
        %v208 = vld [vmem:[%s170 + $0x50] sm:$0xff]
        %v209 = vld [vmem:[%s170 + $0x58] sm:$0xff]
        %v210 = vld [vmem:[%s170 + $0x60] sm:$0xff]
        %v211 = vld [vmem:[%s170 + $0x68] sm:$0xff]
        %v212 = vld [vmem:[%s170 + $0x70] sm:$0xff]
        %v213 = vld [vmem:[%s170 + $0x78] sm:$0xff]
        %v214 = vpack.c.bf16 %v199, %v198
        %v215 = vpack.c.bf16 %v201, %v200
        %v216 = vpack.c.bf16 %v203, %v202
        %v217 = vpack.c.bf16 %v205, %v204
        %v218 = vpack.c.bf16 %v207, %v206
        %v219 = vpack.c.bf16 %v209, %v208
        %v220 = vpack.c.bf16 %v211, %v210
        %v221 = vpack.c.bf16 %v213, %v212
        %v222 = vld [vmem:[#allocation5] sm:$0xff]
        %v223 = vld [vmem:[#allocation5 + $0x8] sm:$0xff]
        %v224 = vld [vmem:[#allocation5 + $0x10] sm:$0xff]
        %v225 = vld [vmem:[#allocation5 + $0x18] sm:$0xff]
        %v226 = vld [vmem:[#allocation5 + $0x20] sm:$0xff]
        %v227 = vld [vmem:[#allocation5 + $0x28] sm:$0xff]
        %v228 = vld [vmem:[#allocation5 + $0x30] sm:$0xff]
        %v229 = vld [vmem:[#allocation5 + $0x38] sm:$0xff]
        %v230 = vld [vmem:[#allocation5 + $0x40] sm:$0xff]
        %v231 = vld [vmem:[#allocation5 + $0x48] sm:$0xff]
        %v232 = vld [vmem:[#allocation5 + $0x50] sm:$0xff]
        %v233 = vld [vmem:[#allocation5 + $0x58] sm:$0xff]
        %v234 = vld [vmem:[#allocation5 + $0x60] sm:$0xff]
        %v235 = vld [vmem:[#allocation5 + $0x68] sm:$0xff]
        %v236 = vld [vmem:[#allocation5 + $0x70] sm:$0xff]
        %v237 = vld [vmem:[#allocation5 + $0x78] sm:$0xff]
        %v238 = vpack.c.bf16 %v223, %v222
        %v239 = vpack.c.bf16 %v225, %v224
        %v240 = vpack.c.bf16 %v227, %v226
        %v241 = vpack.c.bf16 %v229, %v228
        %v242 = vpack.c.bf16 %v231, %v230
        %v243 = vpack.c.bf16 %v233, %v232
        %v244 = vpack.c.bf16 %v235, %v234
        %v245 = vpack.c.bf16 %v237, %v236
        %246 = vmatprep.subr.bf16.mxu0 0
        %247 = vmatpush1.bf16.msra.mxu0 %v238
        %248 = vmatprep.subr.bf16.mxu0 0
        %249 = vmatpush1.bf16.msra.mxu0 %v239
        %250 = vmatprep.subr.bf16.mxu0 0
        %251 = vmatpush1.bf16.msra.mxu0 %v240
        %252 = vmatprep.subr.bf16.mxu0 0
        %253 = vmatpush1.bf16.msra.mxu0 %v241
        %254 = vmatprep.subr.bf16.mxu0 0
        %255 = vmatpush1.bf16.msra.mxu0 %v242
        %256 = vmatprep.subr.bf16.mxu0 0
        %257 = vmatpush1.bf16.msra.mxu0 %v243
        %258 = vmatprep.subr.bf16.mxu0 0
        %259 = vmatpush1.bf16.msra.mxu0 %v244
        %260 = vmatprep.subr.bf16.mxu0 0
        %261 = vmatpush1.bf16.msra.mxu0 %v245
        %262 = vmatprep.subr.bf16.mxu0 0
        %263 = vmatpush1.bf16.msra.mxu0 0
        %264 = vmatprep.subr.bf16.mxu0 0
        %265 = vmatpush1.bf16.msra.mxu0 0
        %266 = vmatprep.subr.bf16.mxu0 0
        %267 = vmatpush1.bf16.msra.mxu0 0
        %268 = vmatprep.subr.bf16.mxu0 0
        %269 = vmatpush1.bf16.msra.mxu0 0
        %270 = vmatprep.subr.bf16.mxu0 0
        %271 = vmatpush1.bf16.msra.mxu0 0
        %272 = vmatprep.subr.bf16.mxu0 0
        %273 = vmatpush1.bf16.msra.mxu0 0
        %274 = vmatprep.subr.bf16.mxu0 0
        %275 = vmatpush1.bf16.msra.mxu0 0
        %276 = vmatprep.subr.bf16.mxu0 0
        %277 = vmatpush1.bf16.msra.mxu0 0
        %278 = vmatprep.mubr.bf16.mxu0 0
        %279 = vmatmul.mubr.bf16.gmra.mrb[0].mxu0 %v214
        %v280 = vpop.f32.mrb[0].mxu0
        %v281 = vadd.f32 0.0, %v280
        %v282 = vpop.f32.mrb[0].mxu0
        %v283 = vpop.f32.mrb[0].mxu0
        %v284 = vadd.f32 0.0, %v283
        %v285 = vpop.f32.mrb[0].mxu0
        %286 = vmatprep.mubr.bf16.mxu0 0
        %287 = vmatmul.mubr.bf16.gmra.mrb[0].mxu0 %v215
        %v288 = vpop.f32.mrb[0].mxu0
        %v289 = vadd.f32 0.0, %v288
        %v290 = vpop.f32.mrb[0].mxu0
        %v291 = vpop.f32.mrb[0].mxu0
        %v292 = vadd.f32 0.0, %v291
        %v293 = vpop.f32.mrb[0].mxu0
        %294 = vmatprep.mubr.bf16.mxu0 0
        %295 = vmatmul.mubr.bf16.gmra.mrb[0].mxu0 %v216
        %v296 = vpop.f32.mrb[0].mxu0
        %v297 = vadd.f32 0.0, %v296
        %v298 = vpop.f32.mrb[0].mxu0
        %v299 = vpop.f32.mrb[0].mxu0
        %v300 = vadd.f32 0.0, %v299
        %v301 = vpop.f32.mrb[0].mxu0
        %302 = vmatprep.mubr.bf16.mxu0 0
        %303 = vmatmul.mubr.bf16.gmra.mrb[0].mxu0 %v217
        %v304 = vpop.f32.mrb[0].mxu0
        %v305 = vadd.f32 0.0, %v304
        %v306 = vpop.f32.mrb[0].mxu0
        %v307 = vpop.f32.mrb[0].mxu0
        %v308 = vadd.f32 0.0, %v307
        %v309 = vpop.f32.mrb[0].mxu0
        %310 = vmatprep.mubr.bf16.mxu0 0
        %311 = vmatmul.mubr.bf16.gmra.mrb[0].mxu0 %v218
        %v312 = vpop.f32.mrb[0].mxu0
        %v313 = vadd.f32 0.0, %v312
        %v314 = vpop.f32.mrb[0].mxu0
        %v315 = vpop.f32.mrb[0].mxu0
        %v316 = vadd.f32 0.0, %v315
        %v317 = vpop.f32.mrb[0].mxu0
        %318 = vmatprep.mubr.bf16.mxu0 0
        %319 = vmatmul.mubr.bf16.gmra.mrb[0].mxu0 %v219
        %v320 = vpop.f32.mrb[0].mxu0
        %v321 = vadd.f32 0.0, %v320
        %v322 = vpop.f32.mrb[0].mxu0
        %v323 = vpop.f32.mrb[0].mxu0
        %v324 = vadd.f32 0.0, %v323
        %v325 = vpop.f32.mrb[0].mxu0
        %326 = vmatprep.mubr.bf16.mxu0 0
        %327 = vmatmul.mubr.bf16.gmra.mrb[0].mxu0 %v220
        %v328 = vpop.f32.mrb[0].mxu0
        %v329 = vadd.f32 0.0, %v328
        %v330 = vpop.f32.mrb[0].mxu0
        %v331 = vpop.f32.mrb[0].mxu0
        %v332 = vadd.f32 0.0, %v331
        %v333 = vpop.f32.mrb[0].mxu0
        %334 = vmatprep.mubr.bf16.mxu0 0
        %335 = vmatmul.mubr.bf16.gmra.mrb[0].mxu0 %v221
        %v336 = vpop.f32.mrb[0].mxu0
        %v337 = vadd.f32 0.0, %v336
        %v338 = vpop.f32.mrb[0].mxu0
        %v339 = vpop.f32.mrb[0].mxu0
        %v340 = vadd.f32 0.0, %v339
        %v341 = vpop.f32.mrb[0].mxu0
        %342 = vdwg.mxu0
        %v343 = vpack.c.bf16 %v284, %v281
        %v344 = vpack.c.bf16 %v292, %v289
        %v345 = vpack.c.bf16 %v300, %v297
        %v346 = vpack.c.bf16 %v308, %v305
        %v347 = vpack.c.bf16 %v316, %v313
        %v348 = vpack.c.bf16 %v324, %v321
        %v349 = vpack.c.bf16 %v332, %v329
        %v350 = vpack.c.bf16 %v340, %v337
        %v359 = vunpack.c.l.b16 %v343
        %v360 = vunpack.c.h.b16 %v343
        %v361 = vunpack.c.l.b16 %v344
        %v362 = vunpack.c.h.b16 %v344
        %v363 = vunpack.c.l.b16 %v345
        %v364 = vunpack.c.h.b16 %v345
        %v365 = vunpack.c.l.b16 %v346
        %v366 = vunpack.c.h.b16 %v346
        %v367 = vunpack.c.l.b16 %v347
        %v368 = vunpack.c.h.b16 %v347
        %v369 = vunpack.c.l.b16 %v348
        %v370 = vunpack.c.h.b16 %v348
        %v371 = vunpack.c.l.b16 %v349
        %v372 = vunpack.c.h.b16 %v349
        %v373 = vunpack.c.l.b16 %v350
        %v374 = vunpack.c.h.b16 %v350
        %v375 = vpack.c.b16 %v359, %v359
        %v376 = vpack.c.b16 %v360, %v360
        %v377 = vpack.c.b16 %v361, %v361
        %v378 = vpack.c.b16 %v362, %v362
        %v379 = vpack.c.b16 %v363, %v363
        %v380 = vpack.c.b16 %v364, %v364
        %v381 = vpack.c.b16 %v365, %v365
        %v382 = vpack.c.b16 %v366, %v366
        %v383 = vpack.c.b16 %v367, %v367
        %v384 = vpack.c.b16 %v368, %v368
        %v385 = vpack.c.b16 %v369, %v369
        %v386 = vpack.c.b16 %v370, %v370
        %v387 = vpack.c.b16 %v371, %v371
        %v388 = vpack.c.b16 %v372, %v372
        %v389 = vpack.c.b16 %v373, %v373
        %v390 = vpack.c.b16 %v374, %v374
        %407 = vst [vmem:[%s194] sm:$0xf] %v375
        %408 = vst [vmem:[%s194 + $0x4] sm:$0xf] %v376
        %409 = vst [vmem:[%s194 + $0x8] sm:$0xf] %v377
        %410 = vst [vmem:[%s194 + $0xc] sm:$0xf] %v378
        %411 = vst [vmem:[%s194 + $0x10] sm:$0xf] %v379
        %412 = vst [vmem:[%s194 + $0x14] sm:$0xf] %v380
        %413 = vst [vmem:[%s194 + $0x18] sm:$0xf] %v381
        %414 = vst [vmem:[%s194 + $0x1c] sm:$0xf] %v382
        %415 = vst [vmem:[%s194 + $0x20] sm:$0xf] %v383
        %416 = vst [vmem:[%s194 + $0x24] sm:$0xf] %v384
        %417 = vst [vmem:[%s194 + $0x28] sm:$0xf] %v385
        %418 = vst [vmem:[%s194 + $0x2c] sm:$0xf] %v386
        %419 = vst [vmem:[%s194 + $0x30] sm:$0xf] %v387
        %420 = vst [vmem:[%s194 + $0x34] sm:$0xf] %v388
        %421 = vst [vmem:[%s194 + $0x38] sm:$0xf] %v389
        %422 = vst [vmem:[%s194 + $0x3c] sm:$0xf] %v390
        %s423 = sand.u32 %s91, 1
        %s424 = scalar_lea.sflag [#allocation4], %s423
        %s425 = sand.u32 %s91, 1
        %s426 = smul.addr %s425, 64
        %s427 = scalar_lea.vmem [#allocation7], %s426
        // Predicated region
        $region37: #{tpu_custom_call.1} parent=27 // pred_check
          %p428 = pneg %p101
        $region38: #{tpu_custom_call.1} parent=27 // pred_check_branch
          %430 = sbr.rel (%p428) target = $region40
        $region39: #{tpu_custom_call.1} parent=27 // pred_region
          %s431 = smul.u32 16, %s25
          %s433 = ssub.s32 1024, 1024
          %434 = vsyncadd %s424, %s433
          %s435 = smul.addr %s24, 16
          %s436 = sadd.s32 %s431, %s435
          %s437 = smul.addr %s436, 64
          %s438 = scalar_lea.hbm %s2, %s437
          %s439 = sshll.u32 %s427, 4
          %s440 = int_to_ptr.vmem [resolvable:$true] %s439
          %445 = dma.vmem_to_hbm [thread:$0]  %s440, 1024, %s438, %s424, 64, 64, 4
        $region40: #{tpu_custom_call.1} parent=27 // pred_fallthru
          _
      $region28: #{tpu_custom_call.1} parent=5 // pred_fallthru
        _
      %p446 = scmp.le.s32.totalorder 2, %s15
      // Predicated region
      $region41: #{tpu_custom_call.1} parent=5 // pred_check
        %p447 = pneg %p446
      $region42: #{tpu_custom_call.1} parent=5 // pred_check_branch
        %449 = sbr.rel (%p447) target = $region44
      $region43: #{tpu_custom_call.1} parent=5 // pred_region
        %s450 = ssub.s32 %s15, 2
        // Predicated region
        $region45: #{tpu_custom_call.1} parent=43 // pred_check
          %p451 = pneg %p107
        $region46: #{tpu_custom_call.1} parent=43 // pred_check_branch
          %453 = sbr.rel (%p451) target = $region48
        $region47: #{tpu_custom_call.1} parent=43 // pred_region
          %s454 = sand.u32 %s92, 1
          %s455 = scalar_lea.sflag [#allocation4], %s454
          %s456 = sand.u32 %s92, 1
          %s457 = smul.addr %s456, 64
          %s458 = scalar_lea.vmem [#allocation7], %s457
          %459 = dma.done %s455, 1024
        $region48: #{tpu_custom_call.1} parent=43 // pred_fallthru
          _
      $region44: #{tpu_custom_call.1} parent=5 // pred_fallthru
        _
    $region6: #{tpu_custom_call.1} parent=1 // loop_footer
      %s19 = sadd.s32 1, %s15
    $region7: #{tpu_custom_call.1} parent=1 // loop_footer_branch
      %14 = sbr.rel target = $region3
    $region8: #{tpu_custom_call.1} parent=1 // loop_exit
      _
    %460 = vsyncpa [#allocation3], 1
    %s461 = scalar_lea.sflag [#allocation3], 1
    %462 = vsyncpa %s461, 1
    %463 = vsyncpa [#allocation6], 1
    %464 = vsyncpa [#allocation4], 1
    %s465 = scalar_lea.sflag [#allocation4], 1
    %466 = vsyncpa %s465, 1

</llo_original>
